<compile_context>
chip_gen: v5e
topology: v5e:2x2
jax: 0.10.0
libtpu: 0.0.40
codegen_flags: <defaults>
</compile_context>

<pallas_src>
import math
import numpy as np
import jax
import jax.numpy as jnp
from jax.experimental import pallas as pl
from jax.experimental.pallas import tpu as pltpu


# ----------------------------------------------------------------------------
# helpers
# ----------------------------------------------------------------------------
def _pick_tile(dim, pref):
    """Largest convenient tile: the preferred size if it divides `dim`,
    otherwise the full dimension (always legal as a full-extent block)."""
    return pref if (dim >= pref and dim % pref == 0) else dim


_VMEM_LIMIT = 48 * 1024 * 1024  # fits the 64 MiB/TC budget of v7x with headroom


# ----------------------------------------------------------------------------
# Kernel 1: fused tiled linear
#   y = [residual +] [gelu(] ( LN(x) | x ) @ W + b [)]
# ----------------------------------------------------------------------------
def _make_linear_kernel(fuse_ln, fuse_gelu, has_residual, eps=1e-5):
    def kernel(*refs):
        idx = 0
        x_ref = refs[idx]; idx += 1
        if fuse_ln:
            g_ref, bln_ref = refs[idx], refs[idx + 1]; idx += 2
        w_ref, b_ref = refs[idx], refs[idx + 1]; idx += 2
        if has_residual:
            res_ref = refs[idx]; idx += 1
        o_ref, acc_ref = refs[idx], refs[idx + 1]

        k = pl.program_id(2)

        @pl.when(k == 0)
        def _():
            acc_ref[...] = jnp.zeros_like(acc_ref)

        x = x_ref[...].astype(jnp.float32)
        if fuse_ln:
            mu = jnp.mean(x, axis=-1, keepdims=True)
            var = jnp.mean(jnp.square(x - mu), axis=-1, keepdims=True)
            x = (x - mu) * jax.lax.rsqrt(var + eps)
            x = x * g_ref[...].astype(jnp.float32) + bln_ref[...].astype(jnp.float32)

        acc_ref[...] += jnp.dot(
            x.astype(jnp.bfloat16), w_ref[...],
            preferred_element_type=jnp.float32)

        @pl.when(k == pl.num_programs(2) - 1)
        def _():
            y = acc_ref[...] + b_ref[...].astype(jnp.float32)
            if fuse_gelu:
                # TODO(synk): exact erf-GELU once lax.erf lowering in Mosaic is
                # guaranteed; tanh approximation used (error < 1e-3).
                c = math.sqrt(2.0 / math.pi)
                y = 0.5 * y * (1.0 + jnp.tanh(c * (y + 0.044715 * y * y * y)))
            if has_residual:
                y = y + res_ref[...].astype(jnp.float32)
            o_ref[...] = y.astype(o_ref.dtype)

    return kernel


def pallas_linear(x2d, w, b, *, ln=None, gelu=False, residual=None,
                  tm=256, tn=256, tk=512):
    """x2d: (M,K) f32, w: (K,N), b: (N,), optional ln=(gamma,beta) over K,
    optional residual (M,N) f32.  Returns (M,N) f32."""
    M, K = x2d.shape
    N = w.shape[1]
    tm = _pick_tile(M, tm)
    tn = _pick_tile(N, tn)
    tk = K if ln is not None else _pick_tile(K, tk)  # LN needs the full row

    in_specs = [pl.BlockSpec((tm, tk), lambda i, j, k: (i, k))]
    args = [x2d]
    if ln is not None:
        g, beta = ln
        in_specs += [pl.BlockSpec((1, tk), lambda i, j, k: (0, k)),
                     pl.BlockSpec((1, tk), lambda i, j, k: (0, k))]
        args += [g.reshape(1, K), beta.reshape(1, K)]
    in_specs += [pl.BlockSpec((tk, tn), lambda i, j, k: (k, j)),
                 pl.BlockSpec((1, tn), lambda i, j, k: (0, j))]
    args += [w.astype(jnp.bfloat16), b.reshape(1, N)]
    if residual is not None:
        in_specs.append(pl.BlockSpec((tm, tn), lambda i, j, k: (i, j)))
        args.append(residual)

    return pl.pallas_call(
        _make_linear_kernel(ln is not None, gelu, residual is not None),
        out_shape=jax.ShapeDtypeStruct((M, N), jnp.float32),
        grid=(M // tm, N // tn, K // tk),
        in_specs=in_specs,
        out_specs=pl.BlockSpec((tm, tn), lambda i, j, k: (i, j)),
        scratch_shapes=[pltpu.VMEM((tm, tn), jnp.float32)],
        compiler_params=pltpu.CompilerParams(
            dimension_semantics=("parallel", "parallel", "arbitrary"),
            vmem_limit_bytes=_VMEM_LIMIT),
    )(*args)


# ----------------------------------------------------------------------------
# Kernel 2: per-(batch, query-tile) attention, all heads per step, with
# in-kernel rotary (pltpu.roll pair-swap, sign/scale folded into tables).
# ----------------------------------------------------------------------------
def _make_attn_kernel(num_heads, head_dim):
    D = num_heads * head_dim

    def kernel(q_ref, k_ref, v_ref,
               cq_ref, spq_ref, smq_ref,
               ck_ref, spk_ref, smk_ref, o_ref):
        def rope(t, cos, sin_p, sin_m):
            # interleaved pair rotation:
            #   even lane i: t[i]*cos - t[i+1]*sin ; odd lane i: t[i]*cos + t[i-1]*sin
            nxt = pltpu.roll(t, shift=D - 1, axis=1)   # value of lane i+1 at lane i
            prv = pltpu.roll(t, shift=1, axis=1)       # value of lane i-1 at lane i
            return t * cos + nxt * sin_p + prv * sin_m

        # rotary (and the folded 1/sqrt(Dh) q-scale) in fp32, lane-dense over
        # all heads at once.
        q = rope(q_ref[0].astype(jnp.float32), cq_ref[...], spq_ref[...], smq_ref[...])
        k = rope(k_ref[0].astype(jnp.float32), ck_ref[...], spk_ref[...], smk_ref[...])
        q = q.astype(jnp.bfloat16)                     # (tq, D)
        k = k.astype(jnp.bfloat16)                     # (S,  D)
        v = v_ref[0].astype(jnp.bfloat16)              # (S,  D)

        # TODO(synk): add a kv grid axis with online (flash-style) softmax for
        # very long sequences; here K/V of one batch stay VMEM-resident.
        outs = []
        for h in range(num_heads):                     # static, fully unrolled
            lo = h * head_dim
            qh = q[:, lo:lo + head_dim]
            kh = k[:, lo:lo + head_dim]
            vh = v[:, lo:lo + head_dim]
            s = jax.lax.dot_general(                   # (tq, S), fp32 acc
                qh, kh, (((1,), (1,)), ((), ())),
                preferred_element_type=jnp.float32)
            m = jnp.max(s, axis=-1, keepdims=True)
            p = jnp.exp(s - m)
            l = jnp.sum(p, axis=-1, keepdims=True)
            p = p * pl.reciprocal(l, approx=True)
            outs.append(jnp.dot(p.astype(jnp.bfloat16), vh,
                                preferred_element_type=jnp.float32))
        # lane-dense concat-heads output == layout expected by the out-proj
        o_ref[0] = jnp.concatenate(outs, axis=-1).astype(o_ref.dtype)

    return kernel


def pallas_attention(qkv, cos_q, sin_p_q, sin_m_q, cos_k, sin_p_k, sin_m_k,
                     num_heads, tq_pref=128):
    """qkv: (B, S, 3*D) f32 in the natural [q-heads | k-heads | v-heads]
    column layout; rotary tables: (S, D) f32.  Returns (B, S, D) f32."""
    B, S, D3 = qkv.shape
    D = D3 // 3
    Dh = D // num_heads
    tq = _pick_tile(S, tq_pref)

    q_spec = pl.BlockSpec((1, tq, D), lambda b, i: (b, i, 0))
    k_spec = pl.BlockSpec((1, S, D), lambda b, i: (b, 0, 1))
    v_spec = pl.BlockSpec((1, S, D), lambda b, i: (b, 0, 2))
    tq_tbl = pl.BlockSpec((tq, D), lambda b, i: (i, 0))
    s_tbl = pl.BlockSpec((S, D), lambda b, i: (0, 0))

    return pl.pallas_call(
        _make_attn_kernel(num_heads, Dh),
        out_shape=jax.ShapeDtypeStruct((B, S, D), jnp.float32),
        grid=(B, S // tq),
        in_specs=[q_spec, k_spec, v_spec,
                  tq_tbl, tq_tbl, tq_tbl, s_tbl, s_tbl, s_tbl],
        out_specs=pl.BlockSpec((1, tq, D), lambda b, i: (b, i, 0)),
        compiler_params=pltpu.CompilerParams(
            dimension_semantics=("parallel", "parallel"),
            vmem_limit_bytes=_VMEM_LIMIT),
    )(qkv, qkv, qkv, cos_q, sin_p_q, sin_m_q, cos_k, sin_p_k, sin_m_k)


# ----------------------------------------------------------------------------
# Kernel 3: final LayerNorm
# ----------------------------------------------------------------------------
def _layernorm_kernel(x_ref, g_ref, b_ref, o_ref):
    x = x_ref[...].astype(jnp.float32)
    mu = jnp.mean(x, axis=-1, keepdims=True)
    var = jnp.mean(jnp.square(x - mu), axis=-1, keepdims=True)
    y = (x - mu) * jax.lax.rsqrt(var + 1e-5)
    o_ref[...] = (y * g_ref[...] + b_ref[...]).astype(o_ref.dtype)


def pallas_layernorm(x2d, g, b, tm=256):
    M, D = x2d.shape
    tm = _pick_tile(M, tm)
    return pl.pallas_call(
        _layernorm_kernel,
        out_shape=jax.ShapeDtypeStruct((M, D), jnp.float32),
        grid=(M // tm,),
        in_specs=[pl.BlockSpec((tm, D), lambda i: (i, 0)),
                  pl.BlockSpec((1, D), lambda i: (0, 0)),
                  pl.BlockSpec((1, D), lambda i: (0, 0))],
        out_specs=pl.BlockSpec((tm, D), lambda i: (i, 0)),
        compiler_params=pltpu.CompilerParams(
            dimension_semantics=("parallel",),
            vmem_limit_bytes=_VMEM_LIMIT),
    )(x2d, g.reshape(1, D), b.reshape(1, D))


# ----------------------------------------------------------------------------
# Rotary tables (RotaryEmbedding(head_dim//2, theta=10000), interleaved pairs),
# tiled across heads to width D, built host-side with numpy.
# ----------------------------------------------------------------------------
def make_rotary_tables(seq_len, head_dim, num_heads, theta=10000.0):
    rot = head_dim // 2                                   # rotated dims per head
    inv_freq = 1.0 / (theta ** (np.arange(0, rot, 2, dtype=np.float32) / rot))
    pos = np.arange(seq_len, dtype=np.float32)
    freqs = pos[:, None] * inv_freq[None, :]              # (S, rot//2)
    freqs_i = np.repeat(freqs, 2, axis=-1)                # (S, rot) interleaved dup
    sin = np.sin(freqs_i)

    cos_h = np.ones((seq_len, head_dim), np.float32)
    cos_h[:, :rot] = np.cos(freqs_i)
    sin_p_h = np.zeros((seq_len, head_dim), np.float32)   # multiplies t[i+1]
    sin_m_h = np.zeros((seq_len, head_dim), np.float32)   # multiplies t[i-1]
    sin_p_h[:, 0:rot:2] = -sin[:, 0::2]                   # even lanes: -sin
    sin_m_h[:, 1:rot:2] = sin[:, 1::2]                    # odd lanes:  +sin

    tile = lambda a: jnp.asarray(np.tile(a, (1, num_heads)))
    return tile(cos_h), tile(sin_p_h), tile(sin_m_h)


# ----------------------------------------------------------------------------
# Full RoformerEncoder forward (Pallas kernels + free reshapes only)
# ----------------------------------------------------------------------------
def roformer_encoder_forward(x, params, num_heads):
    B, S, D = x.shape
    Dh = D // num_heads
    cos, sin_p, sin_m = make_rotary_tables(S, Dh, num_heads)
    scale = 1.0 / math.sqrt(Dh)
    cos_q, sin_p_q, sin_m_q = cos * scale, sin_p * scale, sin_m * scale

    h = x.reshape(B * S, D)
    for lp in params["layers"]:
        # attention block (norm1 fused into the qkv projection)
        qkv = pallas_linear(h, lp["w_qkv"].T, lp["b_qkv"],
                            ln=(lp["ln1_g"], lp["ln1_b"]))            # (B*S, 3D)
        ctx = pallas_attention(qkv.reshape(B, S, 3 * D),
                               cos_q, sin_p_q, sin_m_q, cos, sin_p, sin_m,
                               num_heads)                              # (B, S, D)
        h = pallas_linear(ctx.reshape(B * S, D), lp["w_out"].T, lp["b_out"],
                          residual=h)                                  # +residual
        # FFN block (norm2 + GELU fused into the first FFN matmul)
        ff = pallas_linear(h, lp["w_ffn1"].T, lp["b_ffn1"],
                           ln=(lp["ln2_g"], lp["ln2_b"]), gelu=True)   # (B*S, F)
        h = pallas_linear(ff, lp["w_ffn2"].T, lp["b_ffn2"], residual=h)
    out = pallas_layernorm(h, params["lnf_g"], params["lnf_b"])
    return out.reshape(B, S, D)


# ----------------------------------------------------------------------------
# Pure-JAX fp32 reference (same math as the PyTorch module, eval mode)
# ----------------------------------------------------------------------------
def reference_encoder(x, params, num_heads):
    B, S, D = x.shape
    H = num_heads
    Dh = D // H
    rot = Dh // 2
    inv_freq = 1.0 / (10000.0 ** (jnp.arange(0, rot, 2, dtype=jnp.float32) / rot))
    freqs = jnp.arange(S, dtype=jnp.float32)[:, None] * inv_freq[None, :]
    freqs_i = jnp.repeat(freqs, 2, axis=-1)               # (S, rot)

    def ln(t, g, b, eps=1e-5):
        mu = t.mean(-1, keepdims=True)
        var = ((t - mu) ** 2).mean(-1, keepdims=True)
        return (t - mu) / jnp.sqrt(var + eps) * g + b

    def rope(t):                                          # (B,H,S,Dh)
        t1, t2 = t[..., :rot], t[..., rot:]
        pairs = t1.reshape(*t1.shape[:-1], rot // 2, 2)
        x1, x2 = pairs[..., 0], pairs[..., 1]
        rh = jnp.stack([-x2, x1], axis=-1).reshape(t1.shape)
        t1r = t1 * jnp.cos(freqs_i) + rh * jnp.sin(freqs_i)
        return jnp.concatenate([t1r, t2], axis=-1)

    def gelu_exact(t):
        return 0.5 * t * (1.0 + jax.lax.erf(t / jnp.sqrt(2.0)))

    h = x
    for lp in params["layers"]:
        y = ln(h, lp["ln1_g"], lp["ln1_b"])
        qkv = y @ lp["w_qkv"].T + lp["b_qkv"]
        qkv = qkv.reshape(B, S, 3, H, Dh).transpose(2, 0, 3, 1, 4)
        q, k, v = qkv[0], qkv[1], qkv[2]
        q, k = rope(q), rope(k)
        s = jnp.einsum("bhqd,bhkd->bhqk", q, k) / math.sqrt(Dh)
        a = jax.nn.softmax(s, axis=-1)
        o = jnp.einsum("bhqk,bhkd->bhqd", a, v)
        o = o.transpose(0, 2, 1, 3).reshape(B, S, D)
        h = h + (o @ lp["w_out"].T + lp["b_out"])
        y = ln(h, lp["ln2_g"], lp["ln2_b"])
        ff = gelu_exact(y @ lp["w_ffn1"].T + lp["b_ffn1"]) @ lp["w_ffn2"].T + lp["b_ffn2"]
        h = h + ff
    return ln(h, params["lnf_g"], params["lnf_b"])


# ----------------------------------------------------------------------------
if __name__ == "__main__":
    # small but TPU-friendly shapes: dim multiple of 128 keeps every lane dense
    B, S, D, H, F, L = 2, 16, 128, 4, 256, 2   # batch, seq, dim, heads, ffn, layers

    key = jax.random.PRNGKey(0)
    key, kx = jax.random.split(key)
    x = jax.random.normal(kx, (B, S, D), dtype=jnp.float32)

    def linear_init(k, out_dim, in_dim):
        kw, kb = jax.random.split(k)
        bound = 1.0 / math.sqrt(in_dim)
        w = jax.random.uniform(kw, (out_dim, in_dim), jnp.float32, -bound, bound)
        b = jax.random.uniform(kb, (out_dim,), jnp.float32, -bound, bound)
        return w, b

    def make_layer_params(k):
        ks = jax.random.split(k, 8)
        w_qkv, b_qkv = linear_init(ks[0], 3 * D, D)
        w_out, b_out = linear_init(ks[1], D, D)
        w_f1, b_f1 = linear_init(ks[2], F, D)
        w_f2, b_f2 = linear_init(ks[3], D, F)
        return dict(
            w_qkv=w_qkv, b_qkv=b_qkv, w_out=w_out, b_out=b_out,
            w_ffn1=w_f1, b_ffn1=b_f1, w_ffn2=w_f2, b_ffn2=b_f2,
            ln1_g=1.0 + 0.05 * jax.random.normal(ks[4], (D,), jnp.float32),
            ln1_b=0.05 * jax.random.normal(ks[5], (D,), jnp.float32),
            ln2_g=1.0 + 0.05 * jax.random.normal(ks[6], (D,), jnp.float32),
            ln2_b=0.05 * jax.random.normal(ks[7], (D,), jnp.float32),
        )

    key, kf1, kf2, *layer_keys = jax.random.split(key, 3 + L)
    params = {
        "layers": [make_layer_params(k) for k in layer_keys],
        "lnf_g": 1.0 + 0.05 * jax.random.normal(kf1, (D,), jnp.float32),
        "lnf_b": 0.05 * jax.random.normal(kf2, (D,), jnp.float32),
    }

    out = roformer_encoder_forward(x, params, H)
    out = jax.block_until_ready(out)

    ref = reference_encoder(x, params, H)
    ref = jax.block_until_ready(ref)

    assert out.shape == (B, S, D)
    # bf16 MXU operands + approx reciprocal + tanh-GELU => relaxed tolerance
    np.testing.assert_allclose(np.asarray(out), np.asarray(ref),
                               atol=5e-2, rtol=5e-2)
    print("KERNEL_OK")
</pallas_src>

<mosaic_0001>
module attributes {stable_mosaic.version = 11 : i64} {
  func.func @kernel(%arg0: i32, %arg1: i32, %arg2: i32, %arg3: memref<32x128xf32, #tpu.memory_space<vmem>>, %arg4: memref<1x128xf32, #tpu.memory_space<vmem>>, %arg5: memref<1x128xf32, #tpu.memory_space<vmem>>, %arg6: memref<128x384xbf16, #tpu.memory_space<vmem>>, %arg7: memref<1x384xf32, #tpu.memory_space<vmem>>, %arg8: memref<32x384xf32, #tpu.memory_space<vmem>>, %arg9: memref<32x384xf32, #tpu.memory_space<vmem>>) attributes {dimension_semantics = [#tpu.dimension_semantics<parallel>, #tpu.dimension_semantics<parallel>, #tpu.dimension_semantics<arbitrary>], iteration_bounds = array<i64: 1, 1, 1>, scalar_prefetch = 0 : i64, scratch_operands = 1 : i64, tpu.core_type = #tpu.core_type<tc>, window_params = [{transform_indices = @transform_0, window_bounds = array<i64: 32, 128>}, {transform_indices = @transform_1, window_bounds = array<i64: 1, 128>}, {transform_indices = @transform_2, window_bounds = array<i64: 1, 128>}, {transform_indices = @transform_3, window_bounds = array<i64: 128, 384>}, {transform_indices = @transform_4, window_bounds = array<i64: 1, 384>}, {transform_indices = @transform_5, window_bounds = array<i64: 32, 384>}]} {
    %c0_i32 = arith.constant 0 : i32
    %0 = arith.cmpi eq, %arg2, %c0_i32 : i32
    %1 = arith.extui %0 : i1 to i32
    %c0_i32_0 = arith.constant 0 : i32
    %2 = arith.cmpi ne, %1, %c0_i32_0 : i32
    scf.if %2 {
      %cst_19 = arith.constant 0.000000e+00 : f32
      %37 = vector.broadcast %cst_19 : f32 to vector<32x384xf32>
      %c0_20 = arith.constant 0 : index
      %c0_21 = arith.constant 0 : index
      %38 = vector.load %arg9[%c0_20, %c0_21] : memref<32x384xf32, #tpu.memory_space<vmem>>, vector<32x384xf32>
      tpu.vector_store %arg9[%c0_20, %c0_21], %37 {strides = array<i32>} : memref<32x384xf32, #tpu.memory_space<vmem>>, vector<32x384xf32>,
    } else {
    }
    %c0 = arith.constant 0 : index
    %c0_1 = arith.constant 0 : index
    %3 = vector.load %arg3[%c0, %c0_1] : memref<32x128xf32, #tpu.memory_space<vmem>>, vector<32x128xf32>
    %cst = arith.constant dense<0.000000e+00> : vector<32xf32>
    %4 = vector.multi_reduction <add>, %3, %cst [1] : vector<32x128xf32> to vector<32xf32>
    %5 = vector.shape_cast %4 : vector<32xf32> to vector<32x1xf32>
    %cst_2 = arith.constant 1.280000e+02 : f32
    %6 = vector.broadcast %cst_2 : f32 to vector<32x1xf32>
    %7 = arith.divf %5, %6 : vector<32x1xf32>
    %8 = vector.broadcast %7 : vector<32x1xf32> to vector<32x128xf32>
    %9 = arith.subf %3, %8 : vector<32x128xf32>
    %10 = arith.mulf %9, %9 : vector<32x128xf32>
    %cst_3 = arith.constant dense<0.000000e+00> : vector<32xf32>
    %11 = vector.multi_reduction <add>, %10, %cst_3 [1] : vector<32x128xf32> to vector<32xf32>
    %12 = vector.shape_cast %11 : vector<32xf32> to vector<32x1xf32>
    %cst_4 = arith.constant 1.280000e+02 : f32
    %13 = vector.broadcast %cst_4 : f32 to vector<32x1xf32>
    %14 = arith.divf %12, %13 : vector<32x1xf32>
    %15 = vector.broadcast %7 : vector<32x1xf32> to vector<32x128xf32>
    %16 = arith.subf %3, %15 : vector<32x128xf32>
    %cst_5 = arith.constant 9.99999974E-6 : f32
    %17 = vector.broadcast %cst_5 : f32 to vector<32x1xf32>
    %18 = arith.addf %14, %17 : vector<32x1xf32>
    %19 = math.rsqrt %18 : vector<32x1xf32>
    %20 = vector.broadcast %19 : vector<32x1xf32> to vector<32x128xf32>
    %21 = arith.mulf %16, %20 : vector<32x128xf32>
    %c0_6 = arith.constant 0 : index
    %c0_7 = arith.constant 0 : index
    %22 = vector.load %arg4[%c0_6, %c0_7] : memref<1x128xf32, #tpu.memory_space<vmem>>, vector<1x128xf32>
    %23 = vector.broadcast %22 : vector<1x128xf32> to vector<32x128xf32>
    %24 = arith.mulf %21, %23 : vector<32x128xf32>
    %c0_8 = arith.constant 0 : index
    %c0_9 = arith.constant 0 : index
    %25 = vector.load %arg5[%c0_8, %c0_9] : memref<1x128xf32, #tpu.memory_space<vmem>>, vector<1x128xf32>
    %26 = vector.broadcast %25 : vector<1x128xf32> to vector<32x128xf32>
    %27 = arith.addf %24, %26 : vector<32x128xf32>
    %c0_10 = arith.constant 0 : index
    %c0_11 = arith.constant 0 : index
    %28 = vector.load %arg9[%c0_10, %c0_11] : memref<32x384xf32, #tpu.memory_space<vmem>>, vector<32x384xf32>
    %29 = arith.truncf %27 : vector<32x128xf32> to vector<32x128xbf16>
    %c0_12 = arith.constant 0 : index
    %c0_13 = arith.constant 0 : index
    %30 = vector.load %arg6[%c0_12, %c0_13] : memref<128x384xbf16, #tpu.memory_space<vmem>>, vector<128x384xbf16>
    %cst_14 = arith.constant dense<0.000000e+00> : vector<32x384xf32>
    %31 = tpu.matmul %29, %30, %cst_14 {dimension_numbers = #tpu.dot_dimension_numbers<[1], [0], [0], [1], [0, 0, 1, 1], [], []>} : vector<32x128xbf16>, vector<128x384xbf16>, vector<32x384xf32> -> vector<32x384xf32>
    %32 = arith.addf %28, %31 : vector<32x384xf32>
    %c0_15 = arith.constant 0 : index
    %c0_16 = arith.constant 0 : index
    %33 = vector.load %arg9[%c0_15, %c0_16] : memref<32x384xf32, #tpu.memory_space<vmem>>, vector<32x384xf32>
    tpu.vector_store %arg9[%c0_15, %c0_16], %32 {strides = array<i32>} : memref<32x384xf32, #tpu.memory_space<vmem>>, vector<32x384xf32>,
    %c0_i32_17 = arith.constant 0 : i32
    %34 = arith.cmpi eq, %arg2, %c0_i32_17 : i32
    %35 = arith.extui %34 : i1 to i32
    %c0_i32_18 = arith.constant 0 : i32
    %36 = arith.cmpi ne, %35, %c0_i32_18 : i32
    scf.if %36 {
      %c0_19 = arith.constant 0 : index
      %c0_20 = arith.constant 0 : index
      %37 = vector.load %arg9[%c0_19, %c0_20] : memref<32x384xf32, #tpu.memory_space<vmem>>, vector<32x384xf32>
      %c0_21 = arith.constant 0 : index
      %c0_22 = arith.constant 0 : index
      %38 = vector.load %arg7[%c0_21, %c0_22] : memref<1x384xf32, #tpu.memory_space<vmem>>, vector<1x384xf32>
      %39 = vector.broadcast %38 : vector<1x384xf32> to vector<32x384xf32>
      %40 = arith.addf %37, %39 : vector<32x384xf32>
      %c0_23 = arith.constant 0 : index
      %c0_24 = arith.constant 0 : index
      %41 = vector.load %arg8[%c0_23, %c0_24] : memref<32x384xf32, #tpu.memory_space<vmem>>, vector<32x384xf32>
      tpu.vector_store %arg8[%c0_23, %c0_24], %40 {strides = array<i32>} : memref<32x384xf32, #tpu.memory_space<vmem>>, vector<32x384xf32>,
    } else {
    }
    return
  }
  func.func @transform_0(%arg0: i32, %arg1: i32, %arg2: i32) -> (i32, i32) {
    %c0_i32 = arith.constant 0 : i32
    return %arg0, %arg2 : i32, i32
  }
  func.func @transform_1(%arg0: i32, %arg1: i32, %arg2: i32) -> (i32, i32) {
    %c0_i32 = arith.constant 0 : i32
    %c0_i32_0 = arith.constant 0 : i32
    return %c0_i32, %arg2 : i32, i32
  }
  func.func @transform_2(%arg0: i32, %arg1: i32, %arg2: i32) -> (i32, i32) {
    %c0_i32 = arith.constant 0 : i32
    %c0_i32_0 = arith.constant 0 : i32
    return %c0_i32, %arg2 : i32, i32
  }
  func.func @transform_3(%arg0: i32, %arg1: i32, %arg2: i32) -> (i32, i32) {
    %c0_i32 = arith.constant 0 : i32
    return %arg2, %arg1 : i32, i32
  }
  func.func @transform_4(%arg0: i32, %arg1: i32, %arg2: i32) -> (i32, i32) {
    %c0_i32 = arith.constant 0 : i32
    %c0_i32_0 = arith.constant 0 : i32
    return %c0_i32, %arg1 : i32, i32
  }
  func.func @transform_5(%arg0: i32, %arg1: i32, %arg2: i32) -> (i32, i32) {
    %c0_i32 = arith.constant 0 : i32
    return %arg0, %arg1 : i32, i32
  }
}

</mosaic_0001>

<llo_original>
// kernel: tpu_custom_call.1
$region0: #{tpu_custom_call.1}
  #allocation0 [shape = 'u32[]', space=smem, size = 0x4, offset = 0x4, fixed_abs, tag = 'smem constant byte address 0x4 - core index']
  #allocation1 [shape = 'u32[72,128]{1,0:T(1,128)}', space=vmem, size = 0x9000, scoped, tag = 'internal scratch']
  #allocation2 [shape = 'f32[32,384]{1,0:T(8,128)}', space=vmem, size = 0xc000, scoped, tag = 'scratch operand']
  %s0 = inlined_call_operand.hbm [shape: f32[32,128], index: 0, kind: input, shape index: {}]
  %s1 = inlined_call_operand.hbm [shape: f32[1,128], index: 1, kind: input, shape index: {}]
  %s2 = inlined_call_operand.hbm [shape: f32[1,128], index: 2, kind: input, shape index: {}]
  %s3 = inlined_call_operand.hbm [shape: bf16[128,384], index: 3, kind: input, shape index: {}]
  %s4 = inlined_call_operand.vmem [shape: f32[1,384], index: 4, kind: input, shape index: {}]
  %s5 = inlined_call_operand.hbm [shape: f32[32,384], index: 5, kind: output, shape index: {}]
  %s6 = sld [smem:[#allocation0]]
  $region54: #{tpu_custom_call.1} parent=0
    _
  %s8 = ssub.s32 1, %s6
  %s9 = scalar_select 0, %s8, %s6
  $region1: #{tpu_custom_call.1} parent=0
    #allocation3 [shape = 'u8[16384]{0}', space=vmem, size = 0x4000, scoped, tag = 'input window, operand 0, single buffered']
    #allocation4 [shape = 's32[1]{0}', space=sflag, size = 0x4, scoped, tag = 'scoped memory for tpu_custom_call.1']
    #allocation5 [shape = 's32[1]{0}', space=sflag, size = 0x4, scoped, tag = 'scoped memory for tpu_custom_call.1']
    #allocation6 [shape = 'u8[512]{0}', space=vmem, size = 0x400, scoped, tag = 'input window, operand 1, single buffered']
    #allocation7 [shape = 's32[1]{0}', space=sflag, size = 0x4, scoped, tag = 'scoped memory for tpu_custom_call.1']
    #allocation8 [shape = 'u8[512]{0}', space=vmem, size = 0x400, scoped, tag = 'input window, operand 2, single buffered']
    #allocation9 [shape = 'u8[98304]{0}', space=vmem, size = 0x18000, scoped, tag = 'input window, operand 3, single buffered']
    #allocation10 [shape = 's32[1]{0}', space=sflag, size = 0x4, scoped, tag = 'scoped memory for tpu_custom_call.1']
    #allocation11 [shape = 'u8[49152]{0}', space=vmem, size = 0xc000, scoped, tag = 'output window, operand 0, single buffered']
    %10 = vsyncpa [#allocation4], 0
    %11 = vsyncpa [#allocation7], 0
    %12 = vsyncpa [#allocation10], 0
    %13 = vsyncpa [#allocation5], 0
    // Predicated region
    $region2: #{tpu_custom_call.1} parent=1 // pred_check
      _
    $region3: #{tpu_custom_call.1} parent=1 // pred_check_branch
      %15 = sbr.rel (0) target = $region5
    $region4: #{tpu_custom_call.1} parent=1 // pred_region
      %17 = vsyncadd [#allocation4], 0
      %s18 = sshll.u32 %s0, 4
      %s19 = int_to_ptr.hbm [resolvable:$true] %s18
      %s20 = sshll.u32 [#allocation3], 4
      %s21 = int_to_ptr.vmem [resolvable:$true] %s20
      %26 = dma.hbm_to_vmem [thread:$0]  %s19, 512, %s21, [#allocation4], 128, 128, 8
    $region5: #{tpu_custom_call.1} parent=1 // pred_fallthru
      _
    // Predicated region
    $region6: #{tpu_custom_call.1} parent=1 // pred_check
      _
    $region7: #{tpu_custom_call.1} parent=1 // pred_check_branch
      %28 = sbr.rel (0) target = $region9
    $region8: #{tpu_custom_call.1} parent=1 // pred_region
      %30 = vsyncadd [#allocation7], 0
      %s32 = sshll.u32 %s1, 4
      %s33 = int_to_ptr.hbm [resolvable:$true] %s32
      %s34 = sshll.u32 [#allocation6], 4
      %s35 = int_to_ptr.vmem [resolvable:$true] %s34
      %37 = dma.hbm_to_vmem [thread:$0]  %s33, 16, %s35, [#allocation7]
    $region9: #{tpu_custom_call.1} parent=1 // pred_fallthru
      _
    // Predicated region
    $region10: #{tpu_custom_call.1} parent=1 // pred_check
      _
    $region11: #{tpu_custom_call.1} parent=1 // pred_check_branch
      %39 = sbr.rel (0) target = $region13
    $region12: #{tpu_custom_call.1} parent=1 // pred_region
      %41 = vsyncadd [#allocation7], 0
      %s43 = sshll.u32 %s2, 4
      %s44 = int_to_ptr.hbm [resolvable:$true] %s43
      %s45 = sshll.u32 [#allocation8], 4
      %s46 = int_to_ptr.vmem [resolvable:$true] %s45
      %48 = dma.hbm_to_vmem [thread:$0]  %s44, 16, %s46, [#allocation7]
    $region13: #{tpu_custom_call.1} parent=1 // pred_fallthru
      _
    // Predicated region
    $region14: #{tpu_custom_call.1} parent=1 // pred_check
      _
    $region15: #{tpu_custom_call.1} parent=1 // pred_check_branch
      %50 = sbr.rel (0) target = $region17
    $region16: #{tpu_custom_call.1} parent=1 // pred_region
      %52 = vsyncadd [#allocation10], 0
      %s53 = sshll.u32 %s3, 4
      %s54 = int_to_ptr.hbm [resolvable:$true] %s53
      %s55 = sshll.u32 [#allocation9], 4
      %s56 = int_to_ptr.vmem [resolvable:$true] %s55
      %61 = dma.hbm_to_vmem [thread:$0]  %s54, 3072, %s56, [#allocation10], 192, 192, 12
    $region17: #{tpu_custom_call.1} parent=1 // pred_fallthru
      _
    // Predicated region
    $region18: #{tpu_custom_call.1} parent=1 // pred_check
      _
    $region19: #{tpu_custom_call.1} parent=1 // pred_check_branch
      %63 = sbr.rel (0) target = $region21
    $region20: #{tpu_custom_call.1} parent=1 // pred_region
      _
    $region21: #{tpu_custom_call.1} parent=1 // pred_fallthru
      _
    // Predicated region
    $region22: #{tpu_custom_call.1} parent=1 // pred_check
      _
    $region23: #{tpu_custom_call.1} parent=1 // pred_check_branch
      %65 = sbr.rel (0) target = $region25
    $region24: #{tpu_custom_call.1} parent=1 // pred_region
      %67 = dma.done [#allocation4], 512
    $region25: #{tpu_custom_call.1} parent=1 // pred_fallthru
      _
    // Predicated region
    $region26: #{tpu_custom_call.1} parent=1 // pred_check
      _
    $region27: #{tpu_custom_call.1} parent=1 // pred_check_branch
      %69 = sbr.rel (0) target = $region29
    $region28: #{tpu_custom_call.1} parent=1 // pred_region
      %71 = dma.done [#allocation7], 16
    $region29: #{tpu_custom_call.1} parent=1 // pred_fallthru
      _
    // Predicated region
    $region30: #{tpu_custom_call.1} parent=1 // pred_check
      _
    $region31: #{tpu_custom_call.1} parent=1 // pred_check_branch
      %73 = sbr.rel (0) target = $region33
    $region32: #{tpu_custom_call.1} parent=1 // pred_region
      %75 = dma.done [#allocation7], 16
    $region33: #{tpu_custom_call.1} parent=1 // pred_fallthru
      _
    // Predicated region
    $region34: #{tpu_custom_call.1} parent=1 // pred_check
      _
    $region35: #{tpu_custom_call.1} parent=1 // pred_check_branch
      %77 = sbr.rel (0) target = $region37
    $region36: #{tpu_custom_call.1} parent=1 // pred_region
      %79 = dma.done [#allocation10], 3072
    $region37: #{tpu_custom_call.1} parent=1 // pred_fallthru
      _
    %p80 = scmp.eq.s32.totalorder 0, 0
    // Predicated region
    $region38: #{tpu_custom_call.1} parent=1 // pred_check
      %p81 = pneg %p80
    $region39: #{tpu_custom_call.1} parent=1 // pred_check_branch
      %83 = sbr.rel (%p81) target = $region41
    $region40: #{tpu_custom_call.1} parent=1 // pred_region
      %84 = vst [vmem:[#allocation2] sm:$0xff] 0.0
      %85 = vst [vmem:[#allocation2 + $0x8] sm:$0xff] 0.0
      %86 = vst [vmem:[#allocation2 + $0x10] sm:$0xff] 0.0
      %87 = vst [vmem:[#allocation2 + $0x18] sm:$0xff] 0.0
      %88 = vst [vmem:[#allocation2 + $0x20] sm:$0xff] 0.0
      %89 = vst [vmem:[#allocation2 + $0x28] sm:$0xff] 0.0
      %90 = vst [vmem:[#allocation2 + $0x30] sm:$0xff] 0.0
      %91 = vst [vmem:[#allocation2 + $0x38] sm:$0xff] 0.0
      %92 = vst [vmem:[#allocation2 + $0x40] sm:$0xff] 0.0
      %93 = vst [vmem:[#allocation2 + $0x48] sm:$0xff] 0.0
      %94 = vst [vmem:[#allocation2 + $0x50] sm:$0xff] 0.0
      %95 = vst [vmem:[#allocation2 + $0x58] sm:$0xff] 0.0
    $region41: #{tpu_custom_call.1} parent=1 // pred_fallthru
      _
    %v96 = vld [vmem:[#allocation3] sm:$0xff]
    %v97 = vld [vmem:[#allocation3 + $0x8] sm:$0xff]
    %v98 = vld [vmem:[#allocation3 + $0x10] sm:$0xff]
    %v99 = vld [vmem:[#allocation3 + $0x18] sm:$0xff]
    %100 = vadd.xlane.f32.xlu0 %v96
    %v101 = vpop.xlane.xlu0 %100
    %102 = vadd.xlane.f32.xlu0 %v97
    %v103 = vpop.xlane.xlu0 %102
    %104 = vadd.xlane.f32.xlu0 %v98
    %v105 = vpop.xlane.xlu0 %104
    %106 = vadd.xlane.f32.xlu0 %v99
    %v107 = vpop.xlane.xlu0 %106
    %v108 = vrcp.pop 128.0
    %v109 = vmul.f32 128.0, %v108
    %v110 = vsub.f32 1.0, %v109
    %v111 = vmul.f32 %v108, %v110
    %v112 = vadd.f32 %v108, %v111
    %vm113 = vweird.f32 %v108
    %v114 = vsel %vm113, %v108, %v112
    %v115 = vmul.f32 %v101, %v114
    %v116 = vmul.f32 %v103, %v114
    %v117 = vmul.f32 %v105, %v114
    %v118 = vmul.f32 %v107, %v114
    %v119 = vsub.f32 %v96, %v115
    %v120 = vsub.f32 %v97, %v116
    %v121 = vsub.f32 %v98, %v117
    %v122 = vsub.f32 %v99, %v118
    %v123 = vmul.f32 %v119, %v119
    %v124 = vmul.f32 %v120, %v120
    %v125 = vmul.f32 %v121, %v121
    %v126 = vmul.f32 %v122, %v122
    %127 = vadd.xlane.f32.xlu0 %v123
    %v128 = vpop.xlane.xlu0 %127
    %129 = vadd.xlane.f32.xlu0 %v124
    %v130 = vpop.xlane.xlu0 %129
    %131 = vadd.xlane.f32.xlu0 %v125
    %v132 = vpop.xlane.xlu0 %131
    %133 = vadd.xlane.f32.xlu0 %v126
    %v134 = vpop.xlane.xlu0 %133
    %v135 = vmul.f32 %v128, %v114
    %v136 = vmul.f32 %v130, %v114
    %v137 = vmul.f32 %v132, %v114
    %v138 = vmul.f32 %v134, %v114
    %v139 = vadd.f32 %v135, 1e-05
    %v140 = vadd.f32 %v136, 1e-05
    %v141 = vadd.f32 %v137, 1e-05
    %v142 = vadd.f32 %v138, 1e-05
    %v143 = vrsqrt.pop %v139
    %v144 = vmul.f32 %v143, %v139
    %v145 = vmul.f32 %v144, %v143
    %v146 = vmul.f32 0.5, %v145
    %v147 = vsub.f32 1.5, %v146
    %v148 = vmul.f32 %v143, %v147
    %vm149 = vweird.f32 %v139
    %vm150 = vweird.f32 %v143
    %vm151 = vmor %vm149, %vm150
    %v152 = vsel %vm151, %v143, %v148
    %v153 = vrsqrt.pop %v140
    %v154 = vmul.f32 %v153, %v140
    %v155 = vmul.f32 %v154, %v153
    %v156 = vmul.f32 0.5, %v155
    %v157 = vsub.f32 1.5, %v156
    %v158 = vmul.f32 %v153, %v157
    %vm159 = vweird.f32 %v140
    %vm160 = vweird.f32 %v153
    %vm161 = vmor %vm159, %vm160
    %v162 = vsel %vm161, %v153, %v158
    %v163 = vrsqrt.pop %v141
    %v164 = vmul.f32 %v163, %v141
    %v165 = vmul.f32 %v164, %v163
    %v166 = vmul.f32 0.5, %v165
    %v167 = vsub.f32 1.5, %v166
    %v168 = vmul.f32 %v163, %v167
    %vm169 = vweird.f32 %v141
    %vm170 = vweird.f32 %v163
    %vm171 = vmor %vm169, %vm170
    %v172 = vsel %vm171, %v163, %v168
    %v173 = vrsqrt.pop %v142
    %v174 = vmul.f32 %v173, %v142
    %v175 = vmul.f32 %v174, %v173
    %v176 = vmul.f32 0.5, %v175
    %v177 = vsub.f32 1.5, %v176
    %v178 = vmul.f32 %v173, %v177
    %vm179 = vweird.f32 %v142
    %vm180 = vweird.f32 %v173
    %vm181 = vmor %vm179, %vm180
    %v182 = vsel %vm181, %v173, %v178
    %v183 = vmul.f32 %v119, %v152
    %v184 = vmul.f32 %v120, %v162
    %v185 = vmul.f32 %v121, %v172
    %v186 = vmul.f32 %v122, %v182
    %v187 = vld [vmem:[#allocation6] sm:$0x1]
    %v189 = vperm.slane %v187, 0
    %v191 = vmul.f32 %v183, %v189
    %v192 = vmul.f32 %v184, %v189
    %v193 = vmul.f32 %v185, %v189
    %v194 = vmul.f32 %v186, %v189
    %v195 = vld [vmem:[#allocation8] sm:$0x1]
    %v197 = vperm.slane %v195, 0
    %v199 = vadd.f32 %v191, %v197
    %v200 = vadd.f32 %v192, %v197
    %v201 = vadd.f32 %v193, %v197
    %v202 = vadd.f32 %v194, %v197
    %v203 = vld [vmem:[#allocation2] sm:$0xff]
    %v204 = vld [vmem:[#allocation2 + $0x8] sm:$0xff]
    %v205 = vld [vmem:[#allocation2 + $0x10] sm:$0xff]
    %v206 = vld [vmem:[#allocation2 + $0x18] sm:$0xff]
    %v207 = vld [vmem:[#allocation2 + $0x20] sm:$0xff]
    %v208 = vld [vmem:[#allocation2 + $0x28] sm:$0xff]
    %v209 = vld [vmem:[#allocation2 + $0x30] sm:$0xff]
    %v210 = vld [vmem:[#allocation2 + $0x38] sm:$0xff]
    %v211 = vld [vmem:[#allocation2 + $0x40] sm:$0xff]
    %v212 = vld [vmem:[#allocation2 + $0x48] sm:$0xff]
    %v213 = vld [vmem:[#allocation2 + $0x50] sm:$0xff]
    %v214 = vld [vmem:[#allocation2 + $0x58] sm:$0xff]
    %v215 = vpack.c.bf16 %v200, %v199
    %v216 = vpack.c.bf16 %v202, %v201
    %v217 = vld [vmem:[#allocation9] sm:$0xff]
    %v218 = vld [vmem:[#allocation9 + $0x8] sm:$0xf]
    %v219 = vld [vmem:[#allocation9 + $0xc] sm:$0xff]
    %v220 = vld [vmem:[#allocation9 + $0x14] sm:$0xf]
    %v221 = vld [vmem:[#allocation9 + $0x18] sm:$0xff]
    %v222 = vld [vmem:[#allocation9 + $0x20] sm:$0xf]
    %v223 = vld [vmem:[#allocation9 + $0x24] sm:$0xff]
    %v224 = vld [vmem:[#allocation9 + $0x2c] sm:$0xf]
    %v225 = vld [vmem:[#allocation9 + $0x30] sm:$0xff]
    %v226 = vld [vmem:[#allocation9 + $0x38] sm:$0xf]
    %v227 = vld [vmem:[#allocation9 + $0x3c] sm:$0xff]
    %v228 = vld [vmem:[#allocation9 + $0x44] sm:$0xf]
    %v229 = vld [vmem:[#allocation9 + $0x48] sm:$0xff]
    %v230 = vld [vmem:[#allocation9 + $0x50] sm:$0xf]
    %v231 = vld [vmem:[#allocation9 + $0x54] sm:$0xff]
    %v232 = vld [vmem:[#allocation9 + $0x5c] sm:$0xf]
    %v233 = vld [vmem:[#allocation9 + $0x60] sm:$0xff]
    %v234 = vld [vmem:[#allocation9 + $0x68] sm:$0xf]
    %v235 = vld [vmem:[#allocation9 + $0x6c] sm:$0xff]
    %v236 = vld [vmem:[#allocation9 + $0x74] sm:$0xf]
    %v237 = vld [vmem:[#allocation9 + $0x78] sm:$0xff]
    %v238 = vld [vmem:[#allocation9 + $0x80] sm:$0xf]
    %v239 = vld [vmem:[#allocation9 + $0x84] sm:$0xff]
    %v240 = vld [vmem:[#allocation9 + $0x8c] sm:$0xf]
    %v241 = vld [vmem:[#allocation9 + $0x90] sm:$0xff]
    %v242 = vld [vmem:[#allocation9 + $0x98] sm:$0xf]
    %v243 = vld [vmem:[#allocation9 + $0x9c] sm:$0xff]
    %v244 = vld [vmem:[#allocation9 + $0xa4] sm:$0xf]
    %v245 = vld [vmem:[#allocation9 + $0xa8] sm:$0xff]
    %v246 = vld [vmem:[#allocation9 + $0xb0] sm:$0xf]
    %v247 = vld [vmem:[#allocation9 + $0xb4] sm:$0xff]
    %v248 = vld [vmem:[#allocation9 + $0xbc] sm:$0xf]
    %v281 = vunpack.c.l.b16 %v217
    %v282 = vunpack.c.h.b16 %v217
    %v283 = vunpack.c.l.b16 %v218
    %v284 = vunpack.c.l.b16 %v219
    %v285 = vunpack.c.h.b16 %v219
    %v286 = vunpack.c.l.b16 %v220
    %v287 = vunpack.c.l.b16 %v221
    %v288 = vunpack.c.h.b16 %v221
    %v289 = vunpack.c.l.b16 %v222
    %v290 = vunpack.c.l.b16 %v223
    %v291 = vunpack.c.h.b16 %v223
    %v292 = vunpack.c.l.b16 %v224
    %v293 = vunpack.c.l.b16 %v225
    %v294 = vunpack.c.h.b16 %v225
    %v295 = vunpack.c.l.b16 %v226
    %v296 = vunpack.c.l.b16 %v227
    %v297 = vunpack.c.h.b16 %v227
    %v298 = vunpack.c.l.b16 %v228
    %v299 = vunpack.c.l.b16 %v229
    %v300 = vunpack.c.h.b16 %v229
    %v301 = vunpack.c.l.b16 %v230
    %v302 = vunpack.c.l.b16 %v231
    %v303 = vunpack.c.h.b16 %v231
    %v304 = vunpack.c.l.b16 %v232
    %v305 = vunpack.c.l.b16 %v233
    %v306 = vunpack.c.h.b16 %v233
    %v307 = vunpack.c.l.b16 %v234
    %v308 = vunpack.c.l.b16 %v235
    %v309 = vunpack.c.h.b16 %v235
    %v310 = vunpack.c.l.b16 %v236
    %v311 = vunpack.c.l.b16 %v237
    %v312 = vunpack.c.h.b16 %v237
    %v313 = vunpack.c.l.b16 %v238
    %v314 = vunpack.c.l.b16 %v239
    %v315 = vunpack.c.h.b16 %v239
    %v316 = vunpack.c.l.b16 %v240
    %v317 = vunpack.c.l.b16 %v241
    %v318 = vunpack.c.h.b16 %v241
    %v319 = vunpack.c.l.b16 %v242
    %v320 = vunpack.c.l.b16 %v243
    %v321 = vunpack.c.h.b16 %v243
    %v322 = vunpack.c.l.b16 %v244
    %v323 = vunpack.c.l.b16 %v245
    %v324 = vunpack.c.h.b16 %v245
    %v325 = vunpack.c.l.b16 %v246
    %v326 = vunpack.c.l.b16 %v247
    %v327 = vunpack.c.h.b16 %v247
    %v328 = vunpack.c.l.b16 %v248
    %v329 = vpack.c.b16 %v284, %v281
    %v330 = vpack.c.b16 %v285, %v282
    %v331 = vpack.c.b16 %v286, %v283
    %v332 = vpack.c.b16 %v290, %v287
    %v333 = vpack.c.b16 %v291, %v288
    %v334 = vpack.c.b16 %v292, %v289
    %v335 = vpack.c.b16 %v296, %v293
    %v336 = vpack.c.b16 %v297, %v294
    %v337 = vpack.c.b16 %v298, %v295
    %v338 = vpack.c.b16 %v302, %v299
    %v339 = vpack.c.b16 %v303, %v300
    %v340 = vpack.c.b16 %v304, %v301
    %v341 = vpack.c.b16 %v308, %v305
    %v342 = vpack.c.b16 %v309, %v306
    %v343 = vpack.c.b16 %v310, %v307
    %v344 = vpack.c.b16 %v314, %v311
    %v345 = vpack.c.b16 %v315, %v312
    %v346 = vpack.c.b16 %v316, %v313
    %v347 = vpack.c.b16 %v320, %v317
    %v348 = vpack.c.b16 %v321, %v318
    %v349 = vpack.c.b16 %v322, %v319
    %v350 = vpack.c.b16 %v326, %v323
    %v351 = vpack.c.b16 %v327, %v324
    %v352 = vpack.c.b16 %v328, %v325
    %377 = vmatpush.bf16.msra.mxu0 %v350
    %378 = vmatpush.bf16.msra.mxu0 %v347
    %379 = vmatpush.bf16.msra.mxu0 %v344
    %380 = vmatpush.bf16.msra.mxu0 %v341
    %381 = vmatpush.bf16.msra.mxu0 %v338
    %382 = vmatpush.bf16.msra.mxu0 %v335
    %383 = vmatpush.bf16.msra.mxu0 %v332
    %384 = vmatpush.bf16.msra.mxu0 %v329
    %385 = vmatmul.bf16.gmra.mxu0 %v215
    %v386 = vpop.f32.mrf.mxu0
    %v387 = vadd.f32 0.0, %v386
    %v388 = vpop.f32.mrf.mxu0
    %v389 = vadd.f32 0.0, %v388
    %390 = vmatmul.bf16.gmra.mxu0 %v216
    %v391 = vpop.f32.mrf.mxu0
    %v392 = vadd.f32 0.0, %v391
    %v393 = vpop.f32.mrf.mxu0
    %v394 = vadd.f32 0.0, %v393
    %395 = vdwg.mxu0
    %396 = vmatpush.bf16.msra.mxu0 %v351
    %397 = vmatpush.bf16.msra.mxu0 %v348
    %398 = vmatpush.bf16.msra.mxu0 %v345
    %399 = vmatpush.bf16.msra.mxu0 %v342
    %400 = vmatpush.bf16.msra.mxu0 %v339
    %401 = vmatpush.bf16.msra.mxu0 %v336
    %402 = vmatpush.bf16.msra.mxu0 %v333
    %403 = vmatpush.bf16.msra.mxu0 %v330
    %404 = vmatmul.bf16.gmra.mxu0 %v215
    %v405 = vpop.f32.mrf.mxu0
    %v406 = vadd.f32 0.0, %v405
    %v407 = vpop.f32.mrf.mxu0
    %v408 = vadd.f32 0.0, %v407
    %409 = vmatmul.bf16.gmra.mxu0 %v216
    %v410 = vpop.f32.mrf.mxu0
    %v411 = vadd.f32 0.0, %v410
    %v412 = vpop.f32.mrf.mxu0
    %v413 = vadd.f32 0.0, %v412
    %414 = vdwg.mxu0
    %415 = vmatpush.bf16.msra.mxu0 %v352
    %416 = vmatpush.bf16.msra.mxu0 %v349
    %417 = vmatpush.bf16.msra.mxu0 %v346
    %418 = vmatpush.bf16.msra.mxu0 %v343
    %419 = vmatpush.bf16.msra.mxu0 %v340
    %420 = vmatpush.bf16.msra.mxu0 %v337
    %421 = vmatpush.bf16.msra.mxu0 %v334
    %422 = vmatpush.bf16.msra.mxu0 %v331
    %423 = vmatmul.bf16.gmra.mxu0 %v215
    %v424 = vpop.f32.mrf.mxu0
    %v425 = vadd.f32 0.0, %v424
    %v426 = vpop.f32.mrf.mxu0
    %v427 = vadd.f32 0.0, %v426
    %428 = vmatmul.bf16.gmra.mxu0 %v216
    %v429 = vpop.f32.mrf.mxu0
    %v430 = vadd.f32 0.0, %v429
    %v431 = vpop.f32.mrf.mxu0
    %v432 = vadd.f32 0.0, %v431
    %433 = vdwg.mxu0
    %v434 = vadd.f32 %v203, %v387
    %v435 = vadd.f32 %v204, %v406
    %v436 = vadd.f32 %v205, %v425
    %v437 = vadd.f32 %v206, %v389
    %v438 = vadd.f32 %v207, %v408
    %v439 = vadd.f32 %v208, %v427
    %v440 = vadd.f32 %v209, %v392
    %v441 = vadd.f32 %v210, %v411
    %v442 = vadd.f32 %v211, %v430
    %v443 = vadd.f32 %v212, %v394
    %v444 = vadd.f32 %v213, %v413
    %v445 = vadd.f32 %v214, %v432
    %446 = vst [vmem:[#allocation2] sm:$0xff] %v434
    %447 = vst [vmem:[#allocation2 + $0x8] sm:$0xff] %v435
    %448 = vst [vmem:[#allocation2 + $0x10] sm:$0xff] %v436
    %449 = vst [vmem:[#allocation2 + $0x18] sm:$0xff] %v437
    %450 = vst [vmem:[#allocation2 + $0x20] sm:$0xff] %v438
    %451 = vst [vmem:[#allocation2 + $0x28] sm:$0xff] %v439
    %452 = vst [vmem:[#allocation2 + $0x30] sm:$0xff] %v440
    %453 = vst [vmem:[#allocation2 + $0x38] sm:$0xff] %v441
    %454 = vst [vmem:[#allocation2 + $0x40] sm:$0xff] %v442
    %455 = vst [vmem:[#allocation2 + $0x48] sm:$0xff] %v443
    %456 = vst [vmem:[#allocation2 + $0x50] sm:$0xff] %v444
    %457 = vst [vmem:[#allocation2 + $0x58] sm:$0xff] %v445
    // Predicated region
    $region42: #{tpu_custom_call.1} parent=1 // pred_check
      %p458 = pneg %p80
    $region43: #{tpu_custom_call.1} parent=1 // pred_check_branch
      %460 = sbr.rel (%p458) target = $region45
    $region44: #{tpu_custom_call.1} parent=1 // pred_region
      %v461 = vld [vmem:[#allocation2] sm:$0xff]
      %v462 = vld [vmem:[#allocation2 + $0x8] sm:$0xff]
      %v463 = vld [vmem:[#allocation2 + $0x10] sm:$0xff]
      %v464 = vld [vmem:[#allocation2 + $0x18] sm:$0xff]
      %v465 = vld [vmem:[#allocation2 + $0x20] sm:$0xff]
      %v466 = vld [vmem:[#allocation2 + $0x28] sm:$0xff]
      %v467 = vld [vmem:[#allocation2 + $0x30] sm:$0xff]
      %v468 = vld [vmem:[#allocation2 + $0x38] sm:$0xff]
      %v469 = vld [vmem:[#allocation2 + $0x40] sm:$0xff]
      %v470 = vld [vmem:[#allocation2 + $0x48] sm:$0xff]
      %v471 = vld [vmem:[#allocation2 + $0x50] sm:$0xff]
      %v472 = vld [vmem:[#allocation2 + $0x58] sm:$0xff]
      %v473 = vld [vmem:[%s4] sm:$0x7]
      %v475 = vperm.slane %v473, 0
      %v476 = vperm.slane %v473, 1
      %v477 = vperm.slane %v473, 2
      %v481 = vadd.f32 %v461, %v475
      %v482 = vadd.f32 %v462, %v476
      %v483 = vadd.f32 %v463, %v477
      %v484 = vadd.f32 %v464, %v475
      %v485 = vadd.f32 %v465, %v476
      %v486 = vadd.f32 %v466, %v477
      %v487 = vadd.f32 %v467, %v475
      %v488 = vadd.f32 %v468, %v476
      %v489 = vadd.f32 %v469, %v477
      %v490 = vadd.f32 %v470, %v475
      %v491 = vadd.f32 %v471, %v476
      %v492 = vadd.f32 %v472, %v477
      %493 = vst [vmem:[#allocation11] sm:$0xff] %v481
      %494 = vst [vmem:[#allocation11 + $0x8] sm:$0xff] %v482
      %495 = vst [vmem:[#allocation11 + $0x10] sm:$0xff] %v483
      %496 = vst [vmem:[#allocation11 + $0x18] sm:$0xff] %v484
      %497 = vst [vmem:[#allocation11 + $0x20] sm:$0xff] %v485
      %498 = vst [vmem:[#allocation11 + $0x28] sm:$0xff] %v486
      %499 = vst [vmem:[#allocation11 + $0x30] sm:$0xff] %v487
      %500 = vst [vmem:[#allocation11 + $0x38] sm:$0xff] %v488
      %501 = vst [vmem:[#allocation11 + $0x40] sm:$0xff] %v489
      %502 = vst [vmem:[#allocation11 + $0x48] sm:$0xff] %v490
      %503 = vst [vmem:[#allocation11 + $0x50] sm:$0xff] %v491
      %504 = vst [vmem:[#allocation11 + $0x58] sm:$0xff] %v492
    $region45: #{tpu_custom_call.1} parent=1 // pred_fallthru
      _
    // Predicated region
    $region46: #{tpu_custom_call.1} parent=1 // pred_check
      _
    $region47: #{tpu_custom_call.1} parent=1 // pred_check_branch
      %506 = sbr.rel (0) target = $region49
    $region48: #{tpu_custom_call.1} parent=1 // pred_region
      %508 = vsyncadd [#allocation5], 0
      %s509 = sshll.u32 [#allocation11], 4
      %s510 = int_to_ptr.vmem [resolvable:$true] %s509
      %s511 = sshll.u32 %s5, 4
      %s512 = int_to_ptr.hbm [resolvable:$true] %s511
      %517 = dma.vmem_to_hbm [thread:$0]  %s510, 1536, %s512, [#allocation5], 384, 384, 24
    $region49: #{tpu_custom_call.1} parent=1 // pred_fallthru
      _
    // Predicated region
    $region50: #{tpu_custom_call.1} parent=1 // pred_check
      _
    $region51: #{tpu_custom_call.1} parent=1 // pred_check_branch
      %519 = sbr.rel (0) target = $region53
    $region52: #{tpu_custom_call.1} parent=1 // pred_region
      %521 = dma.done [#allocation5], 1536
    $region53: #{tpu_custom_call.1} parent=1 // pred_fallthru
      _
    %522 = vsyncpa [#allocation4], 1
    %523 = vsyncpa [#allocation7], 1
    %524 = vsyncpa [#allocation10], 1
    %525 = vsyncpa [#allocation5], 1

</llo_original>
